<compile_context>
chip_gen: v6e
topology: v6e:2x2x1
jax: 0.10.0
libtpu: 0.0.40
codegen_flags: <defaults>
</compile_context>

<pallas_src>
import functools
import math

import jax
import jax.numpy as jnp
from jax import lax
from jax.experimental import pallas as pl
from jax.experimental.pallas import tpu as pltpu

BN_EPS = 1e-5
_LANE = 128
_MIB = 1024 * 1024


# --------------------------------------------------------------------------------------
# VMEM budget / tile selection
# --------------------------------------------------------------------------------------
def _vmem_limit_bytes():
    """Generation-aware scoped-VMEM request: ~60% of physical, clamped to [16, 96] MiB.
    ~38 MiB on 64-MiB/TC chips (v7x), ~76 MiB on 128-MiB chips (v5e/v6e)."""
    cap = 64 * _MIB
    try:
        info = pltpu.get_tpu_info()
        cap = int(getattr(info, "vmem_capacity_bytes", cap) or cap)
    except Exception:
        pass
    return int(min(max(cap * 0.6, 16 * _MIB), 96 * _MIB))


def _pick_tile_n(n, c_in, c_out, dtype_bytes, vmem_limit, max_tile_n=None):
    """VMEM-budget-driven, lane-dense spatial tile; N is padded up to a multiple of it."""
    # Per grid step Pallas double-buffers the streamed x tile and (pass 2) the out tile.
    per_col = 2 * (c_in + c_out) * dtype_bytes
    tile = (vmem_limit // 2) // max(per_col, 1)
    tile = (tile // _LANE) * _LANE
    tile = max(_LANE, min(tile, 8192))
    if max_tile_n is not None:
        tile = max(_LANE, min(tile, (max_tile_n // _LANE) * _LANE))
    if n <= tile:
        return n, n                         # one full-extent block along N (always legal)
    n_pad = -(-n // tile) * tile            # pad up to a tile multiple; zeros don't perturb stats
    return tile, n_pad


# --------------------------------------------------------------------------------------
# Kernels
# --------------------------------------------------------------------------------------
def _fused_resident_kernel(x_ref, w_ref, b_ref, gamma_ref, beta_ref, o_ref, y_ref, *, eps):
    """Whole problem resident in VMEM: exact Conv1d(k=1) + BN(train) + ReLU, one HBM read of X."""
    nb = x_ref.shape[0]
    w = w_ref[...]                                      # (C_out, C_in), input dtype
    b = b_ref[...]                                      # (C_out, 1) f32
    m = jnp.float32(nb * x_ref.shape[2])

    s = jnp.zeros_like(b)
    for i in range(nb):                                 # small static batch (fast path only)
        yi = jnp.dot(w, x_ref[i], preferred_element_type=jnp.float32) + b
        y_ref[i] = yi
        s = s + jnp.sum(yi, axis=1, keepdims=True)
    mean = s / m

    v = jnp.zeros_like(b)
    for i in range(nb):
        d = y_ref[i] - mean
        v = v + jnp.sum(d * d, axis=1, keepdims=True)
    var = v / m

    scale = gamma_ref[...] * lax.rsqrt(var + eps)       # (C_out, 1)
    shift = beta_ref[...] - scale * mean
    for i in range(nb):
        o_ref[i] = jnp.maximum(scale * y_ref[i] + shift, 0.0).astype(o_ref.dtype)


def _stats_gram_kernel(x_ref, sum_ref, gram_ref):
    """Per-batch partial sum(x) and Gram X X^T, accumulated over spatial tiles."""
    @pl.when(pl.program_id(1) == 0)
    def _init():
        sum_ref[...] = jnp.zeros_like(sum_ref)
        gram_ref[...] = jnp.zeros_like(gram_ref)

    xb = x_ref[...]                                     # (C_in, TILE_N), input dtype (bf16/f32)
    sum_ref[...] += jnp.sum(xb, axis=1, keepdims=True, dtype=jnp.float32)
    # Contract on the last axes of both operands (no explicit .T / XLU transpose).
    gram_ref[...] += lax.dot_general(xb, xb,
                                     dimension_numbers=(((1,), (1,)), ((), ())),
                                     preferred_element_type=jnp.float32)


def _stats_moment_kernel(w_ref, x_ref, sum_ref, sq_ref):
    """Per-batch partial first/second moments of y0 = W @ x (bias-free: Var(y) == Var(y0))."""
    @pl.when(pl.program_id(1) == 0)
    def _init():
        sum_ref[...] = jnp.zeros_like(sum_ref)
        sq_ref[...] = jnp.zeros_like(sq_ref)

    y0 = jnp.dot(w_ref[...], x_ref[...], preferred_element_type=jnp.float32)  # (C_out, TILE_N)
    sum_ref[...] += jnp.sum(y0, axis=1, keepdims=True)
    sq_ref[...] += jnp.sum(y0 * y0, axis=1, keepdims=True)


def _conv_affine_relu_kernel(w_ref, shift_ref, x_ref, o_ref):
    """out = relu(W_eff @ x + shift); conv bias + BN affine already folded into W_eff / shift."""
    y = jnp.dot(w_ref[...], x_ref[...], preferred_element_type=jnp.float32)   # (C_out, TILE_N)
    y = y + shift_ref[...]                                                    # broadcast (C_out,1)
    o_ref[...] = jnp.maximum(y, 0.0).astype(o_ref.dtype)


# --------------------------------------------------------------------------------------
# Wrapper
# --------------------------------------------------------------------------------------
def conv_bn_relu_1d(x, weight, bias, gamma, beta, eps=BN_EPS, *,
                    use_fused=None, max_tile_n=None):
    """x: (B, C_in, N); weight: (C_out, C_in) or (C_out, C_in, 1); bias/gamma/beta: (C_out,)."""
    if weight.ndim == 3:
        weight = weight[..., 0]                       # PyTorch Conv1d(k=1) weight layout
    B, C_in, N = x.shape
    C_out = weight.shape[0]
    out_dtype = x.dtype
    itemsize = jnp.dtype(x.dtype).itemsize
    vmem_limit = _vmem_limit_bytes()

    # ----------------- fast path: everything resident in VMEM, single HBM read of X -----------------
    resident_bytes = (B * C_in * N * itemsize          # X
                      + B * C_out * N * itemsize       # out
                      + B * C_out * N * 4              # f32 y scratch
                      + (C_out * C_in + 3 * C_out) * 4)
    fused_ok = (resident_bytes <= vmem_limit // 3) and (B <= 16)
    if use_fused is None:
        use_fused = fused_ok
    if use_fused:
        kern = functools.partial(_fused_resident_kernel, eps=float(eps))
        return pl.pallas_call(
            kern,
            out_shape=jax.ShapeDtypeStruct((B, C_out, N), out_dtype),
            scratch_shapes=[pltpu.VMEM((B, C_out, N), jnp.float32)],
            compiler_params=pltpu.CompilerParams(vmem_limit_bytes=vmem_limit),
            cost_estimate=pl.CostEstimate(
                flops=int(2 * B * N * C_out * C_in),
                transcendentals=int(C_out),
                bytes_accessed=int(B * (C_in + C_out) * N * itemsize)),
        )(x,
          weight.astype(x.dtype),
          bias.astype(jnp.float32)[:, None],
          gamma.astype(jnp.float32)[:, None],
          beta.astype(jnp.float32)[:, None])

    # ----------------- tiled two-pass path -----------------
    tile_n, n_pad = _pick_tile_n(N, C_in, C_out, itemsize, vmem_limit, max_tile_n)
    n_tiles = n_pad // tile_n
    x_p = x if n_pad == N else jnp.pad(x, ((0, 0), (0, 0), (0, n_pad - N)))

    w32 = weight.astype(jnp.float32)
    b32 = bias.astype(jnp.float32)
    m = jnp.float32(B * N)                 # true sample count; zero padding adds nothing to stats
    x_bytes = int(B * C_in * n_pad * itemsize)

    if C_out >= C_in:
        # pass 1a: per-batch partial sum(x) + Gram (cheaper than a W@x pass when C_out >= C_in)
        sum_x, gram = pl.pallas_call(
            _stats_gram_kernel,
            out_shape=(jax.ShapeDtypeStruct((B, C_in, 1), jnp.float32),
                       jax.ShapeDtypeStruct((B, C_in, C_in), jnp.float32)),
            grid_spec=pltpu.PrefetchScalarGridSpec(
                num_scalar_prefetch=0,
                grid=(B, n_tiles),
                in_specs=[pl.BlockSpec((None, C_in, tile_n), lambda b, n: (b, 0, n))],
                out_specs=(pl.BlockSpec((None, C_in, 1), lambda b, n: (b, 0, 0)),
                           pl.BlockSpec((None, C_in, C_in), lambda b, n: (b, 0, 0))),
            ),
            compiler_params=pltpu.CompilerParams(
                dimension_semantics=("parallel", "arbitrary"),
                vmem_limit_bytes=vmem_limit),
            cost_estimate=pl.CostEstimate(
                flops=int(2 * B * n_pad * C_in * C_in),
                transcendentals=0,
                bytes_accessed=x_bytes),
        )(x_p)
        mean_x = jnp.sum(sum_x, axis=0) / m                          # (C_in, 1)
        cov_x = jnp.sum(gram, axis=0) / m - mean_x @ mean_x.T        # (C_in, C_in)
        var_y = jnp.sum((w32 @ cov_x) * w32, axis=1)                 # (C_out,) = w_c^T Cov(x) w_c
        mean_y = w32 @ mean_x[:, 0] + b32
    else:
        # pass 1b: per-batch partial moments of y0 = W @ x (no bias; variance is bias-invariant)
        sum_y0, sq_y0 = pl.pallas_call(
            _stats_moment_kernel,
            out_shape=(jax.ShapeDtypeStruct((B, C_out, 1), jnp.float32),
                       jax.ShapeDtypeStruct((B, C_out, 1), jnp.float32)),
            grid_spec=pltpu.PrefetchScalarGridSpec(
                num_scalar_prefetch=0,
                grid=(B, n_tiles),
                in_specs=[pl.BlockSpec((C_out, C_in), lambda b, n: (0, 0)),
                          pl.BlockSpec((None, C_in, tile_n), lambda b, n: (b, 0, n))],
                out_specs=(pl.BlockSpec((None, C_out, 1), lambda b, n: (b, 0, 0)),
                           pl.BlockSpec((None, C_out, 1), lambda b, n: (b, 0, 0))),
            ),
            compiler_params=pltpu.CompilerParams(
                dimension_semantics=("parallel", "arbitrary"),
                vmem_limit_bytes=vmem_limit),
            cost_estimate=pl.CostEstimate(
                flops=int(2 * B * n_pad * C_out * C_in),
                transcendentals=0,
                bytes_accessed=x_bytes),
        )(weight.astype(x.dtype), x_p)
        mean_y0 = jnp.sum(sum_y0, axis=0)[:, 0] / m                  # (C_out,)
        var_y = jnp.sum(sq_y0, axis=0)[:, 0] / m - mean_y0 * mean_y0
        mean_y = mean_y0 + b32

    var_y = jnp.maximum(var_y, 0.0)        # one-pass formula can go slightly negative in f32
    scale = gamma.astype(jnp.float32) * lax.rsqrt(var_y + jnp.float32(eps))
    shift = beta.astype(jnp.float32) + scale * (b32 - mean_y)
    w_eff = (scale[:, None] * w32).astype(x.dtype)                   # bf16-friendly MXU operand
    shift2d = shift[:, None]                                         # (C_out, 1) f32

    # pass 2: tiled pointwise conv + folded affine + ReLU, single lane-dense write.
    # NOTE: padded columns contain relu(shift); they are sliced away below and never consumed.
    out = pl.pallas_call(
        _conv_affine_relu_kernel,
        out_shape=jax.ShapeDtypeStruct((B, C_out, n_pad), out_dtype),
        grid_spec=pltpu.PrefetchScalarGridSpec(
            num_scalar_prefetch=0,
            grid=(B, n_tiles),
            in_specs=[pl.BlockSpec((C_out, C_in), lambda b, n: (0, 0)),     # resident W_eff
                      pl.BlockSpec((C_out, 1), lambda b, n: (0, 0)),        # resident shift
                      pl.BlockSpec((None, C_in, tile_n), lambda b, n: (b, 0, n))],
            out_specs=pl.BlockSpec((None, C_out, tile_n), lambda b, n: (b, 0, n)),
        ),
        compiler_params=pltpu.CompilerParams(
            dimension_semantics=("parallel", "parallel"),
            vmem_limit_bytes=vmem_limit),
        cost_estimate=pl.CostEstimate(
            flops=int(2 * B * n_pad * C_out * C_in),
            transcendentals=0,
            bytes_accessed=int(x_bytes + B * C_out * n_pad * itemsize)),
    )(w_eff, shift2d, x_p)

    return out if n_pad == N else out[:, :, :N]


# --------------------------------------------------------------------------------------
# Pure-JAX reference: Conv1d(k=1, bias) + BatchNorm1d(train) + ReLU
# --------------------------------------------------------------------------------------
def _reference(x, weight, bias, gamma, beta, eps=BN_EPS):
    if weight.ndim == 3:
        weight = weight[..., 0]
    y = jnp.einsum("oc,bcn->bon", weight, x) + bias[None, :, None]
    mean = jnp.mean(y, axis=(0, 2), keepdims=True)
    var = jnp.mean((y - mean) ** 2, axis=(0, 2), keepdims=True)
    y = gamma[None, :, None] * (y - mean) * lax.rsqrt(var + eps) + beta[None, :, None]
    return jnp.maximum(y, 0.0)


if __name__ == "__main__":
    def _check(x, w, b, g, bt, **kw):
        out = jax.block_until_ready(conv_bn_relu_1d(x, w, b, g, bt, **kw))
        ref = _reference(x, w, b, g, bt)
        assert out.shape == ref.shape, (out.shape, ref.shape)
        err = float(jnp.max(jnp.abs(out - ref)))
        assert jnp.allclose(out, ref, atol=1e-4, rtol=1e-4), err

    root = jax.random.PRNGKey(0)
    k1, k2, k3 = jax.random.split(root, 3)

    # Primary small test (module-consistent shapes): VMEM-resident fused fast path.
    B, C_in, C_out, N = 2, 4, 32, 16
    kx, kw, kb = jax.random.split(k1, 3)
    x = jax.random.normal(kx, (B, C_in, N), jnp.float32)
    w = jax.random.normal(kw, (C_out, C_in, 1), jnp.float32) * 0.1    # PyTorch Conv1d(k=1) weight
    b = jax.random.normal(kb, (C_out,), jnp.float32) * 0.1            # Conv1d bias
    g = jnp.ones((C_out,), jnp.float32)                               # BN weight (default init)
    bt = jnp.zeros((C_out,), jnp.float32)                             # BN bias (default init)
    _check(x, w, b, g, bt)

    # Tiled two-pass path, Gram stats variant (C_out >= C_in), awkward N -> padding + 2 tiles.
    kx, kw, kb, kg, kt = jax.random.split(k2, 5)
    B2, Ci2, Co2, N2 = 2, 8, 32, 200
    x2 = jax.random.normal(kx, (B2, Ci2, N2), jnp.float32)
    w2 = jax.random.normal(kw, (Co2, Ci2), jnp.float32) * 0.2
    b2 = jax.random.normal(kb, (Co2,), jnp.float32) * 0.1
    g2 = 1.0 + 0.1 * jax.random.normal(kg, (Co2,), jnp.float32)
    t2 = 0.1 * jax.random.normal(kt, (Co2,), jnp.float32)
    _check(x2, w2, b2, g2, t2, use_fused=False, max_tile_n=128)

    # Tiled two-pass path, moments-of-y stats variant (C_in > C_out).
    kx, kw, kb, kg, kt = jax.random.split(k3, 5)
    B3, Ci3, Co3, N3 = 2, 32, 8, 200
    x3 = jax.random.normal(kx, (B3, Ci3, N3), jnp.float32)
    w3 = jax.random.normal(kw, (Co3, Ci3), jnp.float32) * 0.2
    b3 = jax.random.normal(kb, (Co3,), jnp.float32) * 0.1
    g3 = 1.0 + 0.1 * jax.random.normal(kg, (Co3,), jnp.float32)
    t3 = 0.1 * jax.random.normal(kt, (Co3,), jnp.float32)
    _check(x3, w3, b3, g3, t3, use_fused=False, max_tile_n=128)

    print("KERNEL_OK")
</pallas_src>

<mosaic_0001>
module attributes {stable_mosaic.version = 11 : i64} {
  func.func @_fused_resident_kernel(%arg0: memref<2x4x16xf32, #tpu.memory_space<vmem>>, %arg1: memref<32x4xf32, #tpu.memory_space<vmem>>, %arg2: memref<32x1xf32, #tpu.memory_space<vmem>>, %arg3: memref<32x1xf32, #tpu.memory_space<vmem>>, %arg4: memref<32x1xf32, #tpu.memory_space<vmem>>, %arg5: memref<2x32x16xf32, #tpu.memory_space<vmem>>, %arg6: memref<2x32x16xf32, #tpu.memory_space<vmem>>) attributes {dimension_semantics = [], scalar_prefetch = 0 : i64, scratch_operands = 1 : i64, tpu.core_type = #tpu.core_type<tc>} {
    %c0 = arith.constant 0 : index
    %c0_0 = arith.constant 0 : index
    %0 = vector.load %arg1[%c0, %c0_0] : memref<32x4xf32, #tpu.memory_space<vmem>>, vector<32x4xf32>
    %c0_1 = arith.constant 0 : index
    %c0_2 = arith.constant 0 : index
    %1 = vector.load %arg2[%c0_1, %c0_2] : memref<32x1xf32, #tpu.memory_space<vmem>>, vector<32x1xf32>
    %cst = arith.constant 0.000000e+00 : f32
    %2 = vector.broadcast %cst : f32 to vector<32x1xf32>
    %c0_3 = arith.constant 0 : index
    %c0_4 = arith.constant 0 : index
    %c0_5 = arith.constant 0 : index
    %3 = vector.load %arg0[%c0_3, %c0_4, %c0_5] : memref<2x4x16xf32, #tpu.memory_space<vmem>>, vector<1x4x16xf32>
    %4 = vector.shape_cast %3 : vector<1x4x16xf32> to vector<4x16xf32>
    %cst_6 = arith.constant dense<0.000000e+00> : vector<32x16xf32>
    %5 = tpu.matmul %0, %4, %cst_6 {dimension_numbers = #tpu.dot_dimension_numbers<[1], [0], [0], [1], [0, 0, 1, 1], [], []>} : vector<32x4xf32>, vector<4x16xf32>, vector<32x16xf32> -> vector<32x16xf32>
    %6 = vector.broadcast %1 : vector<32x1xf32> to vector<32x16xf32>
    %7 = arith.addf %5, %6 : vector<32x16xf32>
    %c0_7 = arith.constant 0 : index
    %c0_8 = arith.constant 0 : index
    %c0_9 = arith.constant 0 : index
    %8 = vector.load %arg6[%c0_7, %c0_8, %c0_9] : memref<2x32x16xf32, #tpu.memory_space<vmem>>, vector<1x32x16xf32>
    %9 = vector.shape_cast %8 : vector<1x32x16xf32> to vector<32x16xf32>
    %10 = vector.shape_cast %7 : vector<32x16xf32> to vector<1x32x16xf32>
    tpu.vector_store %arg6[%c0_7, %c0_8, %c0_9], %10 {strides = array<i32>} : memref<2x32x16xf32, #tpu.memory_space<vmem>>, vector<1x32x16xf32>,
    %cst_10 = arith.constant dense<0.000000e+00> : vector<32xf32>
    %11 = vector.multi_reduction <add>, %7, %cst_10 [1] : vector<32x16xf32> to vector<32xf32>
    %12 = vector.shape_cast %11 : vector<32xf32> to vector<32x1xf32>
    %13 = arith.addf %2, %12 : vector<32x1xf32>
    %c1 = arith.constant 1 : index
    %c0_11 = arith.constant 0 : index
    %c0_12 = arith.constant 0 : index
    %14 = vector.load %arg0[%c1, %c0_11, %c0_12] : memref<2x4x16xf32, #tpu.memory_space<vmem>>, vector<1x4x16xf32>
    %15 = vector.shape_cast %14 : vector<1x4x16xf32> to vector<4x16xf32>
    %cst_13 = arith.constant dense<0.000000e+00> : vector<32x16xf32>
    %16 = tpu.matmul %0, %15, %cst_13 {dimension_numbers = #tpu.dot_dimension_numbers<[1], [0], [0], [1], [0, 0, 1, 1], [], []>} : vector<32x4xf32>, vector<4x16xf32>, vector<32x16xf32> -> vector<32x16xf32>
    %17 = vector.broadcast %1 : vector<32x1xf32> to vector<32x16xf32>
    %18 = arith.addf %16, %17 : vector<32x16xf32>
    %c1_14 = arith.constant 1 : index
    %c0_15 = arith.constant 0 : index
    %c0_16 = arith.constant 0 : index
    %19 = vector.load %arg6[%c1_14, %c0_15, %c0_16] : memref<2x32x16xf32, #tpu.memory_space<vmem>>, vector<1x32x16xf32>
    %20 = vector.shape_cast %19 : vector<1x32x16xf32> to vector<32x16xf32>
    %21 = vector.shape_cast %18 : vector<32x16xf32> to vector<1x32x16xf32>
    tpu.vector_store %arg6[%c1_14, %c0_15, %c0_16], %21 {strides = array<i32>} : memref<2x32x16xf32, #tpu.memory_space<vmem>>, vector<1x32x16xf32>,
    %cst_17 = arith.constant dense<0.000000e+00> : vector<32xf32>
    %22 = vector.multi_reduction <add>, %18, %cst_17 [1] : vector<32x16xf32> to vector<32xf32>
    %23 = vector.shape_cast %22 : vector<32xf32> to vector<32x1xf32>
    %24 = arith.addf %13, %23 : vector<32x1xf32>
    %cst_18 = arith.constant 3.200000e+01 : f32
    %25 = vector.broadcast %cst_18 : f32 to vector<32x1xf32>
    %26 = arith.divf %24, %25 : vector<32x1xf32>
    %cst_19 = arith.constant 0.000000e+00 : f32
    %27 = vector.broadcast %cst_19 : f32 to vector<32x1xf32>
    %c0_20 = arith.constant 0 : index
    %c0_21 = arith.constant 0 : index
    %c0_22 = arith.constant 0 : index
    %28 = vector.load %arg6[%c0_20, %c0_21, %c0_22] : memref<2x32x16xf32, #tpu.memory_space<vmem>>, vector<1x32x16xf32>
    %29 = vector.shape_cast %28 : vector<1x32x16xf32> to vector<32x16xf32>
    %30 = vector.broadcast %26 : vector<32x1xf32> to vector<32x16xf32>
    %31 = arith.subf %29, %30 : vector<32x16xf32>
    %32 = arith.mulf %31, %31 : vector<32x16xf32>
    %cst_23 = arith.constant dense<0.000000e+00> : vector<32xf32>
    %33 = vector.multi_reduction <add>, %32, %cst_23 [1] : vector<32x16xf32> to vector<32xf32>
    %34 = vector.shape_cast %33 : vector<32xf32> to vector<32x1xf32>
    %35 = arith.addf %27, %34 : vector<32x1xf32>
    %c1_24 = arith.constant 1 : index
    %c0_25 = arith.constant 0 : index
    %c0_26 = arith.constant 0 : index
    %36 = vector.load %arg6[%c1_24, %c0_25, %c0_26] : memref<2x32x16xf32, #tpu.memory_space<vmem>>, vector<1x32x16xf32>
    %37 = vector.shape_cast %36 : vector<1x32x16xf32> to vector<32x16xf32>
    %38 = vector.broadcast %26 : vector<32x1xf32> to vector<32x16xf32>
    %39 = arith.subf %37, %38 : vector<32x16xf32>
    %40 = arith.mulf %39, %39 : vector<32x16xf32>
    %cst_27 = arith.constant dense<0.000000e+00> : vector<32xf32>
    %41 = vector.multi_reduction <add>, %40, %cst_27 [1] : vector<32x16xf32> to vector<32xf32>
    %42 = vector.shape_cast %41 : vector<32xf32> to vector<32x1xf32>
    %43 = arith.addf %35, %42 : vector<32x1xf32>
    %cst_28 = arith.constant 3.200000e+01 : f32
    %44 = vector.broadcast %cst_28 : f32 to vector<32x1xf32>
    %45 = arith.divf %43, %44 : vector<32x1xf32>
    %c0_29 = arith.constant 0 : index
    %c0_30 = arith.constant 0 : index
    %46 = vector.load %arg3[%c0_29, %c0_30] : memref<32x1xf32, #tpu.memory_space<vmem>>, vector<32x1xf32>
    %cst_31 = arith.constant 9.99999974E-6 : f32
    %47 = vector.broadcast %cst_31 : f32 to vector<32x1xf32>
    %48 = arith.addf %45, %47 : vector<32x1xf32>
    %49 = math.rsqrt %48 : vector<32x1xf32>
    %50 = arith.mulf %46, %49 : vector<32x1xf32>
    %c0_32 = arith.constant 0 : index
    %c0_33 = arith.constant 0 : index
    %51 = vector.load %arg4[%c0_32, %c0_33] : memref<32x1xf32, #tpu.memory_space<vmem>>, vector<32x1xf32>
    %52 = arith.mulf %50, %26 : vector<32x1xf32>
    %53 = arith.subf %51, %52 : vector<32x1xf32>
    %c0_34 = arith.constant 0 : index
    %c0_35 = arith.constant 0 : index
    %c0_36 = arith.constant 0 : index
    %54 = vector.load %arg6[%c0_34, %c0_35, %c0_36] : memref<2x32x16xf32, #tpu.memory_space<vmem>>, vector<1x32x16xf32>
    %55 = vector.shape_cast %54 : vector<1x32x16xf32> to vector<32x16xf32>
    %56 = vector.broadcast %50 : vector<32x1xf32> to vector<32x16xf32>
    %57 = arith.mulf %56, %55 : vector<32x16xf32>
    %58 = vector.broadcast %53 : vector<32x1xf32> to vector<32x16xf32>
    %59 = arith.addf %57, %58 : vector<32x16xf32>
    %cst_37 = arith.constant 0.000000e+00 : f32
    %60 = vector.broadcast %cst_37 : f32 to vector<32x16xf32>
    %61 = arith.maximumf %59, %60 : vector<32x16xf32>
    %c0_38 = arith.constant 0 : index
    %c0_39 = arith.constant 0 : index
    %c0_40 = arith.constant 0 : index
    %62 = vector.load %arg5[%c0_38, %c0_39, %c0_40] : memref<2x32x16xf32, #tpu.memory_space<vmem>>, vector<1x32x16xf32>
    %63 = vector.shape_cast %62 : vector<1x32x16xf32> to vector<32x16xf32>
    %64 = vector.shape_cast %61 : vector<32x16xf32> to vector<1x32x16xf32>
    tpu.vector_store %arg5[%c0_38, %c0_39, %c0_40], %64 {strides = array<i32>} : memref<2x32x16xf32, #tpu.memory_space<vmem>>, vector<1x32x16xf32>,
    %c1_41 = arith.constant 1 : index
    %c0_42 = arith.constant 0 : index
    %c0_43 = arith.constant 0 : index
    %65 = vector.load %arg6[%c1_41, %c0_42, %c0_43] : memref<2x32x16xf32, #tpu.memory_space<vmem>>, vector<1x32x16xf32>
    %66 = vector.shape_cast %65 : vector<1x32x16xf32> to vector<32x16xf32>
    %67 = vector.broadcast %50 : vector<32x1xf32> to vector<32x16xf32>
    %68 = arith.mulf %67, %66 : vector<32x16xf32>
    %69 = vector.broadcast %53 : vector<32x1xf32> to vector<32x16xf32>
    %70 = arith.addf %68, %69 : vector<32x16xf32>
    %cst_44 = arith.constant 0.000000e+00 : f32
    %71 = vector.broadcast %cst_44 : f32 to vector<32x16xf32>
    %72 = arith.maximumf %70, %71 : vector<32x16xf32>
    %c1_45 = arith.constant 1 : index
    %c0_46 = arith.constant 0 : index
    %c0_47 = arith.constant 0 : index
    %73 = vector.load %arg5[%c1_45, %c0_46, %c0_47] : memref<2x32x16xf32, #tpu.memory_space<vmem>>, vector<1x32x16xf32>
    %74 = vector.shape_cast %73 : vector<1x32x16xf32> to vector<32x16xf32>
    %75 = vector.shape_cast %72 : vector<32x16xf32> to vector<1x32x16xf32>
    tpu.vector_store %arg5[%c1_45, %c0_46, %c0_47], %75 {strides = array<i32>} : memref<2x32x16xf32, #tpu.memory_space<vmem>>, vector<1x32x16xf32>,
    return
  }
}

</mosaic_0001>

<llo_original>
// kernel: tpu_custom_call.1
$region0: #{tpu_custom_call.1}
  #allocation0 [shape = 'u32[]', space=smem, size = 0x4, offset = 0x4, fixed_abs, tag = 'smem constant byte address 0x4 - core index']
  #allocation1 [shape = 'u32[144,128]{1,0:T(1,128)}', space=vmem, size = 0x12000, scoped, tag = 'internal scratch']
  #allocation2 [shape = 'f32[2,32,16]{2,1,0:T(8,128)}', space=vmem, size = 0x8000, scoped, tag = 'scratch operand']
  %s0 = inlined_call_operand.vmem [shape: f32[2,4,16], index: 0, kind: input, shape index: {}]
  %s1 = inlined_call_operand.vmem [shape: f32[32,4], index: 1, kind: input, shape index: {}]
  %s2 = inlined_call_operand.vmem [shape: f32[32,1], index: 2, kind: input, shape index: {}]
  %s3 = inlined_call_operand.vmem [shape: f32[32,1], index: 3, kind: input, shape index: {}]
  %s4 = inlined_call_operand.vmem [shape: f32[32,1], index: 4, kind: input, shape index: {}]
  %s5 = inlined_call_operand.vmem [shape: f32[2,32,16], index: 5, kind: output, shape index: {}]
  %s6 = sld [smem:[#allocation0]]
  $region30: #{tpu_custom_call.1} parent=0
    _
  %s8 = ssub.s32 1, %s6
  %s9 = scalar_select 0, %s8, %s6
  // Predicated region
  $region2: #{tpu_custom_call.1} parent=0 // pred_check
    _
  $region3: #{tpu_custom_call.1} parent=0 // pred_check_branch
    %11 = sbr.rel (0) target = $region5
  $region4: #{tpu_custom_call.1} parent=0 // pred_region
    _
  $region5: #{tpu_custom_call.1} parent=0 // pred_fallthru
    _
  // Predicated region
  $region6: #{tpu_custom_call.1} parent=0 // pred_check
    _
  $region7: #{tpu_custom_call.1} parent=0 // pred_check_branch
    %13 = sbr.rel (0) target = $region9
  $region8: #{tpu_custom_call.1} parent=0 // pred_region
    _
  $region9: #{tpu_custom_call.1} parent=0 // pred_fallthru
    _
  // Predicated region
  $region10: #{tpu_custom_call.1} parent=0 // pred_check
    _
  $region11: #{tpu_custom_call.1} parent=0 // pred_check_branch
    %15 = sbr.rel (0) target = $region13
  $region12: #{tpu_custom_call.1} parent=0 // pred_region
    _
  $region13: #{tpu_custom_call.1} parent=0 // pred_fallthru
    _
  // Predicated region
  $region14: #{tpu_custom_call.1} parent=0 // pred_check
    _
  $region15: #{tpu_custom_call.1} parent=0 // pred_check_branch
    %17 = sbr.rel (0) target = $region17
  $region16: #{tpu_custom_call.1} parent=0 // pred_region
    _
  $region17: #{tpu_custom_call.1} parent=0 // pred_fallthru
    _
  // Predicated region
  $region18: #{tpu_custom_call.1} parent=0 // pred_check
    _
  $region19: #{tpu_custom_call.1} parent=0 // pred_check_branch
    %19 = sbr.rel (0) target = $region21
  $region20: #{tpu_custom_call.1} parent=0 // pred_region
    _
  $region21: #{tpu_custom_call.1} parent=0 // pred_fallthru
    _
  %v20 = vld [vmem:[%s1] sm:$0xff]
  %v21 = vld [vmem:[%s1 + $0x8] sm:$0xff]
  %v22 = vld [vmem:[%s1 + $0x10] sm:$0xff]
  %v23 = vld [vmem:[%s1 + $0x18] sm:$0xff]
  %v24 = vld [vmem:[%s2] sm:$0xff]
  %v25 = vld [vmem:[%s2 + $0x8] sm:$0xff]
  %v26 = vld [vmem:[%s2 + $0x10] sm:$0xff]
  %v27 = vld [vmem:[%s2 + $0x18] sm:$0xff]
  %v28 = vld [vmem:[%s0] sm:$0xf]
  %30 = vset.pattern.permute.xlu0 0
  %31 = vperm.xlu0 %30, %v24
  %v32 = vpop.permute.xlu0 %31
  %35 = vset.pattern.permute.xlu0 0
  %36 = vperm.xlu0 %35, %v25
  %v37 = vpop.permute.xlu0 %36
  %40 = vset.pattern.permute.xlu0 0
  %41 = vperm.xlu0 %40, %v26
  %v42 = vpop.permute.xlu0 %41
  %45 = vset.pattern.permute.xlu0 0
  %46 = vperm.xlu0 %45, %v27
  %v47 = vpop.permute.xlu0 %46
  %vm49 = vcmask 31744
  %v51 = vsel %vm49, %v20, 0
  %v54 = vsel %vm49, %v21, 0
  %v57 = vsel %vm49, %v22, 0
  %v60 = vsel %vm49, %v23, 0
  %vm62 = vcmask 1043456
  %v64 = vsel %vm62, %v28, 0
  %66 = vmatprep.subr.mxu0 0.0
  %67 = vmatpush1.msra.mxu0 0.0
  %68 = vmatprep.subr.mxu0 0.0
  %69 = vmatpush1.msra.mxu0 0.0
  %70 = vmatprep.subr.mxu0 0.0
  %71 = vmatpush1.msra.mxu0 0.0
  %72 = vmatprep.subr.mxu0 0.0
  %73 = vmatpush1.msra.mxu0 0.0
  %74 = vmatprep.subr.mxu0 0.0
  %75 = vmatpush1.msra.mxu0 0.0
  %76 = vmatprep.subr.mxu0 0.0
  %77 = vmatpush1.msra.mxu0 0.0
  %78 = vmatprep.subr.mxu0 0.0
  %79 = vmatpush1.msra.mxu0 0.0
  %80 = vmatprep.subr.mxu0 0.0
  %81 = vmatpush1.msra.mxu0 0.0
  %82 = vmatprep.subr.mxu0 0.0
  %83 = vmatpush1.msra.mxu0 0.0
  %84 = vmatprep.subr.mxu0 0.0
  %85 = vmatpush1.msra.mxu0 0.0
  %86 = vmatprep.subr.mxu0 0.0
  %87 = vmatpush1.msra.mxu0 0.0
  %88 = vmatprep.subr.mxu0 0.0
  %89 = vmatpush1.msra.mxu0 0.0
  %90 = vmatprep.subr.mxu0 0.0
  %91 = vmatpush1.msra.mxu0 0.0
  %92 = vmatprep.subr.mxu0 0.0
  %93 = vmatpush1.msra.mxu0 0.0
  %94 = vmatprep.subr.mxu0 0.0
  %95 = vmatpush1.msra.mxu0 0.0
  %96 = vmatprep.subr.mxu0 0.0
  %97 = vmatpush1.msra.mxu0 %v64
  %98 = vmatprep.subr.mxu0 0.0
  %99 = vmatpush2.msra.mxu0 0.0
  %100 = vmatprep.subr.mxu0 0.0
  %101 = vmatpush2.msra.mxu0 0.0
  %102 = vmatprep.subr.mxu0 0.0
  %103 = vmatpush2.msra.mxu0 0.0
  %104 = vmatprep.subr.mxu0 0.0
  %105 = vmatpush2.msra.mxu0 0.0
  %106 = vmatprep.subr.mxu0 0.0
  %107 = vmatpush2.msra.mxu0 0.0
  %108 = vmatprep.subr.mxu0 0.0
  %109 = vmatpush2.msra.mxu0 0.0
  %110 = vmatprep.subr.mxu0 0.0
  %111 = vmatpush2.msra.mxu0 0.0
  %112 = vmatprep.subr.mxu0 0.0
  %113 = vmatpush2.msra.mxu0 0.0
  %114 = vmatprep.subr.mxu0 0.0
  %115 = vmatpush2.msra.mxu0 0.0
  %116 = vmatprep.subr.mxu0 0.0
  %117 = vmatpush2.msra.mxu0 0.0
  %118 = vmatprep.subr.mxu0 0.0
  %119 = vmatpush2.msra.mxu0 0.0
  %120 = vmatprep.subr.mxu0 0.0
  %121 = vmatpush2.msra.mxu0 0.0
  %122 = vmatprep.subr.mxu0 0.0
  %123 = vmatpush2.msra.mxu0 0.0
  %124 = vmatprep.subr.mxu0 0.0
  %125 = vmatpush2.msra.mxu0 0.0
  %126 = vmatprep.subr.mxu0 0.0
  %127 = vmatpush2.msra.mxu0 0.0
  %128 = vmatprep.subr.mxu0 0.0
  %129 = vmatpush2.msra.mxu0 0.0
  %130 = vmatprep.mubr.f32.mxu0 0.0
  %131 = vmatmul.mubr.f32.gmra.mxu0 %v51
  %v132 = vpop.f32.mrf.mxu0
  %v133 = vadd.f32 %v32, %v132
  %v134 = vpop.f32.mrf.mxu0
  %135 = vmatprep.mubr.f32.mxu0 0.0
  %136 = vmatmul.mubr.f32.gmra.mxu0 %v54
  %v137 = vpop.f32.mrf.mxu0
  %v138 = vadd.f32 %v37, %v137
  %v139 = vpop.f32.mrf.mxu0
  %140 = vmatprep.mubr.f32.mxu0 0.0
  %141 = vmatmul.mubr.f32.gmra.mxu0 %v57
  %v142 = vpop.f32.mrf.mxu0
  %v143 = vadd.f32 %v42, %v142
  %v144 = vpop.f32.mrf.mxu0
  %145 = vmatprep.mubr.f32.mxu0 0.0
  %146 = vmatmul.mubr.f32.gmra.mxu0 %v60
  %v147 = vpop.f32.mrf.mxu0
  %v148 = vadd.f32 %v47, %v147
  %v149 = vpop.f32.mrf.mxu0
  %150 = vdwg.mxu0
  %vm151 = vcmask 130048
  %152 = vst.msk [vmem:[#allocation2] sm:$0xff] %vm151, %v133
  %153 = vst.msk [vmem:[#allocation2 + $0x8] sm:$0xff] %vm151, %v138
  %154 = vst.msk [vmem:[#allocation2 + $0x10] sm:$0xff] %vm151, %v143
  %155 = vst.msk [vmem:[#allocation2 + $0x18] sm:$0xff] %vm151, %v148
  %v156 = vsel %vm151, %v133, 0.0
  %157 = vadd.xlane.f32.xlu0 %v156
  %v158 = vpop.xlane.xlu0 %157
  %v159 = vsel %vm151, %v138, 0.0
  %160 = vadd.xlane.f32.xlu0 %v159
  %v161 = vpop.xlane.xlu0 %160
  %v162 = vsel %vm151, %v143, 0.0
  %163 = vadd.xlane.f32.xlu0 %v162
  %v164 = vpop.xlane.xlu0 %163
  %v165 = vsel %vm151, %v148, 0.0
  %166 = vadd.xlane.f32.xlu0 %v165
  %v167 = vpop.xlane.xlu0 %166
  %v168 = vadd.f32 %v158, 0.0
  %v169 = vadd.f32 %v161, 0.0
  %v170 = vadd.f32 %v164, 0.0
  %v171 = vadd.f32 %v167, 0.0
  %s172 = scalar_lea.vmem %s0, 4
  %v173 = vld [vmem:[%s172] sm:$0xf]
  %v175 = vsel %vm62, %v173, 0
  %177 = vmatprep.subr.mxu0 0.0
  %178 = vmatpush1.msra.mxu0 0.0
  %179 = vmatprep.subr.mxu0 0.0
  %180 = vmatpush1.msra.mxu0 0.0
  %181 = vmatprep.subr.mxu0 0.0
  %182 = vmatpush1.msra.mxu0 0.0
  %183 = vmatprep.subr.mxu0 0.0
  %184 = vmatpush1.msra.mxu0 0.0
  %185 = vmatprep.subr.mxu0 0.0
  %186 = vmatpush1.msra.mxu0 0.0
  %187 = vmatprep.subr.mxu0 0.0
  %188 = vmatpush1.msra.mxu0 0.0
  %189 = vmatprep.subr.mxu0 0.0
  %190 = vmatpush1.msra.mxu0 0.0
  %191 = vmatprep.subr.mxu0 0.0
  %192 = vmatpush1.msra.mxu0 0.0
  %193 = vmatprep.subr.mxu0 0.0
  %194 = vmatpush1.msra.mxu0 0.0
  %195 = vmatprep.subr.mxu0 0.0
  %196 = vmatpush1.msra.mxu0 0.0
  %197 = vmatprep.subr.mxu0 0.0
  %198 = vmatpush1.msra.mxu0 0.0
  %199 = vmatprep.subr.mxu0 0.0
  %200 = vmatpush1.msra.mxu0 0.0
  %201 = vmatprep.subr.mxu0 0.0
  %202 = vmatpush1.msra.mxu0 0.0
  %203 = vmatprep.subr.mxu0 0.0
  %204 = vmatpush1.msra.mxu0 0.0
  %205 = vmatprep.subr.mxu0 0.0
  %206 = vmatpush1.msra.mxu0 0.0
  %207 = vmatprep.subr.mxu0 0.0
  %208 = vmatpush1.msra.mxu0 %v175
  %209 = vmatprep.subr.mxu0 0.0
  %210 = vmatpush2.msra.mxu0 0.0
  %211 = vmatprep.subr.mxu0 0.0
  %212 = vmatpush2.msra.mxu0 0.0
  %213 = vmatprep.subr.mxu0 0.0
  %214 = vmatpush2.msra.mxu0 0.0
  %215 = vmatprep.subr.mxu0 0.0
  %216 = vmatpush2.msra.mxu0 0.0
  %217 = vmatprep.subr.mxu0 0.0
  %218 = vmatpush2.msra.mxu0 0.0
  %219 = vmatprep.subr.mxu0 0.0
  %220 = vmatpush2.msra.mxu0 0.0
  %221 = vmatprep.subr.mxu0 0.0
  %222 = vmatpush2.msra.mxu0 0.0
  %223 = vmatprep.subr.mxu0 0.0
  %224 = vmatpush2.msra.mxu0 0.0
  %225 = vmatprep.subr.mxu0 0.0
  %226 = vmatpush2.msra.mxu0 0.0
  %227 = vmatprep.subr.mxu0 0.0
  %228 = vmatpush2.msra.mxu0 0.0
  %229 = vmatprep.subr.mxu0 0.0
  %230 = vmatpush2.msra.mxu0 0.0
  %231 = vmatprep.subr.mxu0 0.0
  %232 = vmatpush2.msra.mxu0 0.0
  %233 = vmatprep.subr.mxu0 0.0
  %234 = vmatpush2.msra.mxu0 0.0
  %235 = vmatprep.subr.mxu0 0.0
  %236 = vmatpush2.msra.mxu0 0.0
  %237 = vmatprep.subr.mxu0 0.0
  %238 = vmatpush2.msra.mxu0 0.0
  %239 = vmatprep.subr.mxu0 0.0
  %240 = vmatpush2.msra.mxu0 0.0
  %241 = vmatprep.mubr.f32.mxu0 0.0
  %242 = vmatmul.mubr.f32.gmra.mxu0 %v51
  %v243 = vpop.f32.mrf.mxu0
  %v244 = vadd.f32 %v32, %v243
  %v245 = vpop.f32.mrf.mxu0
  %246 = vmatprep.mubr.f32.mxu0 0.0
  %247 = vmatmul.mubr.f32.gmra.mxu0 %v54
  %v248 = vpop.f32.mrf.mxu0
  %v249 = vadd.f32 %v37, %v248
  %v250 = vpop.f32.mrf.mxu0
  %251 = vmatprep.mubr.f32.mxu0 0.0
  %252 = vmatmul.mubr.f32.gmra.mxu0 %v57
  %v253 = vpop.f32.mrf.mxu0
  %v254 = vadd.f32 %v42, %v253
  %v255 = vpop.f32.mrf.mxu0
  %256 = vmatprep.mubr.f32.mxu0 0.0
  %257 = vmatmul.mubr.f32.gmra.mxu0 %v60
  %v258 = vpop.f32.mrf.mxu0
  %v259 = vadd.f32 %v47, %v258
  %v260 = vpop.f32.mrf.mxu0
  %261 = vdwg.mxu0
  %s262 = scalar_lea.vmem [#allocation2], 32
  %263 = vst.msk [vmem:[%s262] sm:$0xff] %vm151, %v244
  %264 = vst.msk [vmem:[%s262 + $0x8] sm:$0xff] %vm151, %v249
  %265 = vst.msk [vmem:[%s262 + $0x10] sm:$0xff] %vm151, %v254
  %266 = vst.msk [vmem:[%s262 + $0x18] sm:$0xff] %vm151, %v259
  %v267 = vsel %vm151, %v244, 0.0
  %268 = vadd.xlane.f32.xlu0 %v267
  %v269 = vpop.xlane.xlu0 %268
  %v270 = vsel %vm151, %v249, 0.0
  %271 = vadd.xlane.f32.xlu0 %v270
  %v272 = vpop.xlane.xlu0 %271
  %v273 = vsel %vm151, %v254, 0.0
  %274 = vadd.xlane.f32.xlu0 %v273
  %v275 = vpop.xlane.xlu0 %274
  %v276 = vsel %vm151, %v259, 0.0
  %277 = vadd.xlane.f32.xlu0 %v276
  %v278 = vpop.xlane.xlu0 %277
  %v279 = vadd.f32 %v168, %v269
  %v280 = vadd.f32 %v169, %v272
  %v281 = vadd.f32 %v170, %v275
  %v282 = vadd.f32 %v171, %v278
  %v283 = vrcp.pop 32.0
  %v284 = vmul.f32 %v279, %v283
  %v285 = vmul.f32 %v280, %v283
  %v286 = vmul.f32 %v281, %v283
  %v287 = vmul.f32 %v282, %v283
  %v288 = vld [vmem:[#allocation2] sm:$0xff]
  %v289 = vld [vmem:[#allocation2 + $0x8] sm:$0xff]
  %v290 = vld [vmem:[#allocation2 + $0x10] sm:$0xff]
  %v291 = vld [vmem:[#allocation2 + $0x18] sm:$0xff]
  %v292 = vsub.f32 %v288, %v284
  %v293 = vsub.f32 %v289, %v285
  %v294 = vsub.f32 %v290, %v286
  %v295 = vsub.f32 %v291, %v287
  %v296 = vmul.f32 %v292, %v292
  %v297 = vmul.f32 %v293, %v293
  %v298 = vmul.f32 %v294, %v294
  %v299 = vmul.f32 %v295, %v295
  %v300 = vsel %vm151, %v296, 0.0
  %301 = vadd.xlane.f32.xlu0 %v300
  %v302 = vpop.xlane.xlu0 %301
  %v303 = vsel %vm151, %v297, 0.0
  %304 = vadd.xlane.f32.xlu0 %v303
  %v305 = vpop.xlane.xlu0 %304
  %v306 = vsel %vm151, %v298, 0.0
  %307 = vadd.xlane.f32.xlu0 %v306
  %v308 = vpop.xlane.xlu0 %307
  %v309 = vsel %vm151, %v299, 0.0
  %310 = vadd.xlane.f32.xlu0 %v309
  %v311 = vpop.xlane.xlu0 %310
  %v312 = vadd.f32 %v302, 0.0
  %v313 = vadd.f32 %v305, 0.0
  %v314 = vadd.f32 %v308, 0.0
  %v315 = vadd.f32 %v311, 0.0
  %v316 = vld [vmem:[%s262] sm:$0xff]
  %v317 = vld [vmem:[%s262 + $0x8] sm:$0xff]
  %v318 = vld [vmem:[%s262 + $0x10] sm:$0xff]
  %v319 = vld [vmem:[%s262 + $0x18] sm:$0xff]
  %v320 = vsub.f32 %v316, %v284
  %v321 = vsub.f32 %v317, %v285
  %v322 = vsub.f32 %v318, %v286
  %v323 = vsub.f32 %v319, %v287
  %v324 = vmul.f32 %v320, %v320
  %v325 = vmul.f32 %v321, %v321
  %v326 = vmul.f32 %v322, %v322
  %v327 = vmul.f32 %v323, %v323
  %v328 = vsel %vm151, %v324, 0.0
  %329 = vadd.xlane.f32.xlu0 %v328
  %v330 = vpop.xlane.xlu0 %329
  %v331 = vsel %vm151, %v325, 0.0
  %332 = vadd.xlane.f32.xlu0 %v331
  %v333 = vpop.xlane.xlu0 %332
  %v334 = vsel %vm151, %v326, 0.0
  %335 = vadd.xlane.f32.xlu0 %v334
  %v336 = vpop.xlane.xlu0 %335
  %v337 = vsel %vm151, %v327, 0.0
  %338 = vadd.xlane.f32.xlu0 %v337
  %v339 = vpop.xlane.xlu0 %338
  %v340 = vadd.f32 %v312, %v330
  %v341 = vadd.f32 %v313, %v333
  %v342 = vadd.f32 %v314, %v336
  %v343 = vadd.f32 %v315, %v339
  %v344 = vmul.f32 %v340, %v283
  %v345 = vmul.f32 %v341, %v283
  %v346 = vmul.f32 %v342, %v283
  %v347 = vmul.f32 %v343, %v283
  %v348 = vld [vmem:[%s3] sm:$0xff]
  %v349 = vld [vmem:[%s3 + $0x8] sm:$0xff]
  %v350 = vld [vmem:[%s3 + $0x10] sm:$0xff]
  %v351 = vld [vmem:[%s3 + $0x18] sm:$0xff]
  %v352 = vadd.f32 %v344, 1e-05
  %v353 = vadd.f32 %v345, 1e-05
  %v354 = vadd.f32 %v346, 1e-05
  %v355 = vadd.f32 %v347, 1e-05
  %v356 = vrsqrt.pop %v352
  %v357 = vrsqrt.pop %v353
  %v358 = vrsqrt.pop %v354
  %v359 = vrsqrt.pop %v355
  %v360 = vmul.f32 %v348, %v356
  %v361 = vmul.f32 %v349, %v357
  %v362 = vmul.f32 %v350, %v358
  %v363 = vmul.f32 %v351, %v359
  %v364 = vld [vmem:[%s4] sm:$0xff]
  %v365 = vld [vmem:[%s4 + $0x8] sm:$0xff]
  %v366 = vld [vmem:[%s4 + $0x10] sm:$0xff]
  %v367 = vld [vmem:[%s4 + $0x18] sm:$0xff]
  %v368 = vmul.f32 %v360, %v284
  %v369 = vmul.f32 %v361, %v285
  %v370 = vmul.f32 %v362, %v286
  %v371 = vmul.f32 %v363, %v287
  %v372 = vsub.f32 %v364, %v368
  %v373 = vsub.f32 %v365, %v369
  %v374 = vsub.f32 %v366, %v370
  %v375 = vsub.f32 %v367, %v371
  %377 = vset.pattern.permute.xlu0 0
  %378 = vperm.xlu0 %377, %v360
  %v379 = vpop.permute.xlu0 %378
  %382 = vset.pattern.permute.xlu0 0
  %383 = vperm.xlu0 %382, %v361
  %v384 = vpop.permute.xlu0 %383
  %387 = vset.pattern.permute.xlu0 0
  %388 = vperm.xlu0 %387, %v362
  %v389 = vpop.permute.xlu0 %388
  %392 = vset.pattern.permute.xlu0 0
  %393 = vperm.xlu0 %392, %v363
  %v394 = vpop.permute.xlu0 %393
  %v396 = vmul.f32 %v379, %v288
  %v397 = vmul.f32 %v384, %v289
  %v398 = vmul.f32 %v389, %v290
  %v399 = vmul.f32 %v394, %v291
  %401 = vset.pattern.permute.xlu0 0
  %402 = vperm.xlu0 %401, %v372
  %v403 = vpop.permute.xlu0 %402
  %406 = vset.pattern.permute.xlu0 0
  %407 = vperm.xlu0 %406, %v373
  %v408 = vpop.permute.xlu0 %407
  %411 = vset.pattern.permute.xlu0 0
  %412 = vperm.xlu0 %411, %v374
  %v413 = vpop.permute.xlu0 %412
  %416 = vset.pattern.permute.xlu0 0
  %417 = vperm.xlu0 %416, %v375
  %v418 = vpop.permute.xlu0 %417
  %v420 = vadd.f32 %v396, %v403
  %v421 = vadd.f32 %v397, %v408
  %v422 = vadd.f32 %v398, %v413
  %v423 = vadd.f32 %v399, %v418
  %v424 = vmax.f32 %v420, 0.0
  %v425 = vmax.f32 %v421, 0.0
  %v426 = vmax.f32 %v422, 0.0
  %v427 = vmax.f32 %v423, 0.0
  %428 = vst.msk [vmem:[%s5] sm:$0xff] %vm151, %v424
  %429 = vst.msk [vmem:[%s5 + $0x8] sm:$0xff] %vm151, %v425
  %430 = vst.msk [vmem:[%s5 + $0x10] sm:$0xff] %vm151, %v426
  %431 = vst.msk [vmem:[%s5 + $0x18] sm:$0xff] %vm151, %v427
  %v432 = vld [vmem:[%s262] sm:$0xff]
  %v433 = vld [vmem:[%s262 + $0x8] sm:$0xff]
  %v434 = vld [vmem:[%s262 + $0x10] sm:$0xff]
  %v435 = vld [vmem:[%s262 + $0x18] sm:$0xff]
  %v436 = vmul.f32 %v379, %v432
  %v437 = vmul.f32 %v384, %v433
  %v438 = vmul.f32 %v389, %v434
  %v439 = vmul.f32 %v394, %v435
  %v440 = vadd.f32 %v436, %v403
  %v441 = vadd.f32 %v437, %v408
  %v442 = vadd.f32 %v438, %v413
  %v443 = vadd.f32 %v439, %v418
  %v444 = vmax.f32 %v440, 0.0
  %v445 = vmax.f32 %v441, 0.0
  %v446 = vmax.f32 %v442, 0.0
  %v447 = vmax.f32 %v443, 0.0
  %s448 = scalar_lea.vmem %s5, 32
  %449 = vst.msk [vmem:[%s448] sm:$0xff] %vm151, %v444
  %450 = vst.msk [vmem:[%s448 + $0x8] sm:$0xff] %vm151, %v445
  %451 = vst.msk [vmem:[%s448 + $0x10] sm:$0xff] %vm151, %v446
  %452 = vst.msk [vmem:[%s448 + $0x18] sm:$0xff] %vm151, %v447
  // Predicated region
  $region22: #{tpu_custom_call.1} parent=0 // pred_check
    _
  $region23: #{tpu_custom_call.1} parent=0 // pred_check_branch
    %454 = sbr.rel (0) target = $region25
  $region24: #{tpu_custom_call.1} parent=0 // pred_region
    _
  $region25: #{tpu_custom_call.1} parent=0 // pred_fallthru
    _
  // Predicated region
  $region26: #{tpu_custom_call.1} parent=0 // pred_check
    _
  $region27: #{tpu_custom_call.1} parent=0 // pred_check_branch
    %456 = sbr.rel (0) target = $region29
  $region28: #{tpu_custom_call.1} parent=0 // pred_region
    _
  $region29: #{tpu_custom_call.1} parent=0 // pred_fallthru
    _

</llo_original>
